<compile_context>
chip_gen: v7x
topology: tpu7x:2x2x1
jax: 0.10.0
libtpu: 0.0.40
codegen_flags: <defaults>
</compile_context>

<pallas_src>
import functools

import jax
import jax.numpy as jnp
from jax.experimental import pallas as pl
from jax.experimental.pallas import tpu as pltpu

_LANE = 128      # last dim of every block padded to a multiple of this
_SUBLANE = 8     # batch tiles padded to a multiple of this
# Conservative per-kernel VMEM budget (fits every generation incl. v7x 64 MiB).
_VMEM_BUDGET = 48 * 1024 * 1024


def _round_up(n, m):
    return ((n + m - 1) // m) * m


def _fused_mlp_kernel(*refs, num_layers, negative_slope):
    """refs = (x_ref, w_0..w_{L-1}, b_0..b_{L-1}, o_ref).

    One batch tile: act = x_tile; for each layer act = act @ W + b, with
    leaky_relu on all but the last layer. Intermediates never leave VMEM.
    """
    x_ref = refs[0]
    w_refs = refs[1:1 + num_layers]
    b_refs = refs[1 + num_layers:1 + 2 * num_layers]
    o_ref = refs[1 + 2 * num_layers]

    act = x_ref[...].astype(jnp.float32)
    for i in range(num_layers):          # static unroll over layers
        # bf16 operands -> full-rate MXU; f32 accumulate for accuracy.
        y = jnp.dot(act.astype(jnp.bfloat16), w_refs[i][...],
                    preferred_element_type=jnp.float32)
        y = y + b_refs[i][...]           # bias (1, p_out) f32, broadcasts
        if i < num_layers - 1:
            y = jnp.maximum(y, negative_slope * y)   # leaky_relu (f32 VPU)
        act = y
    o_ref[...] = act.astype(o_ref.dtype)


def init_mlp_params(key, input_dim, hidden_dim, output_dim, num_layers):
    """Deterministic init matching the PyTorch module's layer shapes.
    nn.Linear(n, k) has weight (k, n); we store the transpose (n, k)."""
    h = [hidden_dim] * (num_layers - 1)
    dims_in = [input_dim] + h
    dims_out = h + [output_dim]
    params = []
    for n, k in zip(dims_in, dims_out):
        key, wk, bk = jax.random.split(key, 3)
        bound = 1.0 / jnp.sqrt(n)  # PyTorch default uniform(-1/sqrt(n), 1/sqrt(n))
        w = jax.random.uniform(wk, (n, k), jnp.float32, -bound, bound)
        b = jax.random.uniform(bk, (k,), jnp.float32, -bound, bound)
        params.append((w, b))
    return params


def pad_mlp_params(params, weight_dtype=jnp.bfloat16):
    """One-time param prep (outside the hot path): zero-pad every layer's
    (in, out) dims up to lane multiples, store weights in bf16 (MXU operand
    dtype), biases in f32 shaped (1, p_out). Zero padding keeps the math
    exact; the wrapper slices the result back."""
    padded = []
    for w, b in params:
        n, k = w.shape
        pn, pk = _round_up(n, _LANE), _round_up(k, _LANE)
        w_p = jnp.zeros((pn, pk), weight_dtype).at[:n, :k].set(
            w.astype(weight_dtype))
        b_p = jnp.zeros((1, pk), jnp.float32).at[0, :k].set(
            b.astype(jnp.float32))
        padded.append((w_p, b_p))
    return padded


def _resident_spec(shape):
    """Full-array block with a constant index map -> loaded into VMEM once and
    reused for every batch tile. Request single buffering when the API allows
    it (double-buffering a constant-index block only doubles its footprint)."""
    index_map = lambda i: (0, 0)
    if hasattr(pl, "Buffered"):
        try:
            return pl.BlockSpec(shape, index_map, pipeline_mode=pl.Buffered(1))
        except TypeError:
            pass
    return pl.BlockSpec(shape, index_map)


def mlp_forward(x, padded_params, out_dim, *, negative_slope=0.01, tile_m=512):
    """Fused MLP forward: leaky_relu on all layers but the last.

    x: (batch, in_dim) float32.  padded_params: output of pad_mlp_params.
    Returns (batch, out_dim) float32.
    """
    batch, in_dim = x.shape
    num_layers = len(padded_params)
    p_in = padded_params[0][0].shape[0]
    p_out = padded_params[-1][0].shape[1]
    p_dims = [p_in] + [w.shape[1] for w, _ in padded_params]

    ws = [w for w, _ in padded_params]
    bs = [b for _, b in padded_params]

    weight_bytes = sum(int(w.size) * w.dtype.itemsize for w in ws)
    bias_bytes = sum(int(b.size) * b.dtype.itemsize for b in bs)
    resident_bytes = weight_bytes + bias_bytes
    # TODO(synk): K/N-tiled fallback when resident_bytes exceeds _VMEM_BUDGET.

    def act_bytes(t):
        # x / out tiles double-buffered (f32) + ~2 f32 intermediates of max width
        return 2 * t * p_in * 4 + 2 * t * p_out * 4 + 2 * t * max(p_dims) * 4

    # Batch tile: the largest sublane-aligned tile <= tile_m that fits the
    # VMEM budget together with the resident weights.
    padded_batch_min = _round_up(batch, _SUBLANE)
    tile = max(_SUBLANE, min(_round_up(tile_m, _SUBLANE), padded_batch_min))
    while tile > _SUBLANE and resident_bytes + act_bytes(tile) > _VMEM_BUDGET:
        tile = max(_SUBLANE, _round_up(tile // 2, _SUBLANE))
    # v7x megacore: prefer >= 2 grid steps (without inflating padding) so both
    # TensorCores get a share of the "parallel" batch axis.
    if padded_batch_min // tile < 2 and padded_batch_min >= 2 * _SUBLANE:
        tile = max(_SUBLANE, (padded_batch_min // 2) // _SUBLANE * _SUBLANE)

    # Fast path: skip the wrapper-side pad copy of x when already aligned
    # (the pad is an extra full HBM read+write of x before the kernel).
    if in_dim == p_in and batch % tile == 0:
        x_p, padded_batch = x, batch
    else:
        padded_batch = _round_up(batch, tile)
        x_p = jnp.zeros((padded_batch, p_in), x.dtype).at[:batch, :in_dim].set(x)

    grid = (padded_batch // tile,)

    kernel = functools.partial(
        _fused_mlp_kernel, num_layers=num_layers, negative_slope=negative_slope)

    in_specs = [pl.BlockSpec((tile, p_in), lambda i: (i, 0))]
    for w in ws:
        in_specs.append(_resident_spec(w.shape))
    for b in bs:
        in_specs.append(_resident_spec(b.shape))

    flops = 2 * padded_batch * sum(a * b for a, b in zip(p_dims[:-1], p_dims[1:]))
    bytes_accessed = (int(x_p.size) * x_p.dtype.itemsize
                      + weight_bytes + bias_bytes
                      + padded_batch * p_out * x.dtype.itemsize)
    vmem_limit = int(min(64 * 1024 * 1024,
                         max(32 * 1024 * 1024,
                             2 * (resident_bytes + act_bytes(tile)))))

    out_padded = pl.pallas_call(
        kernel,
        out_shape=jax.ShapeDtypeStruct((padded_batch, p_out), x.dtype),
        grid=grid,
        in_specs=in_specs,
        out_specs=pl.BlockSpec((tile, p_out), lambda i: (i, 0)),
        compiler_params=pltpu.CompilerParams(
            dimension_semantics=("parallel",),
            vmem_limit_bytes=vmem_limit,
        ),
        cost_estimate=pl.CostEstimate(
            flops=flops, transcendentals=0, bytes_accessed=bytes_accessed),
    )(x_p, *ws, *bs)

    return out_padded[:batch, :out_dim]


if __name__ == "__main__":
    key = jax.random.PRNGKey(0)
    batch, input_dim, hidden_dim, output_dim, num_layers = 2, 16, 32, 8, 3

    key, xk, pk = jax.random.split(key, 3)
    x = jax.random.normal(xk, (batch, input_dim), jnp.float32)
    params = init_mlp_params(pk, input_dim, hidden_dim, output_dim, num_layers)
    padded_params = pad_mlp_params(params)

    out = mlp_forward(x, padded_params, output_dim)
    jax.block_until_ready(out)

    # Reference in plain JAX (same math as the PyTorch forward), in f32.
    # The kernel uses bf16 MXU operands with f32 accumulation, so compare
    # with a bf16-appropriate tolerance.
    ref = x
    for i, (w, b) in enumerate(params):
        ref = ref @ w + b
        if i < num_layers - 1:
            ref = jnp.where(ref >= 0, ref, 0.01 * ref)

    assert out.shape == (batch, output_dim), f"bad shape {out.shape}"
    max_err = float(jnp.max(jnp.abs(out - ref)))
    assert jnp.allclose(out, ref, atol=3e-2, rtol=3e-2), (
        f"mismatch vs reference, max abs err {max_err:.3e}")

    print("KERNEL_OK")
</pallas_src>

<mosaic_0001>
module attributes {stable_mosaic.version = 11 : i64} {
  func.func @_fused_mlp_kernel(%arg0: i32, %arg1: memref<8x128xf32, #tpu.memory_space<vmem>>, %arg2: memref<128x128xbf16, #tpu.memory_space<vmem>>, %arg3: memref<128x128xbf16, #tpu.memory_space<vmem>>, %arg4: memref<128x128xbf16, #tpu.memory_space<vmem>>, %arg5: memref<1x128xf32, #tpu.memory_space<vmem>>, %arg6: memref<1x128xf32, #tpu.memory_space<vmem>>, %arg7: memref<1x128xf32, #tpu.memory_space<vmem>>, %arg8: memref<8x128xf32, #tpu.memory_space<vmem>>) attributes {dimension_semantics = [#tpu.dimension_semantics<parallel>], iteration_bounds = array<i64: 1>, scalar_prefetch = 0 : i64, scratch_operands = 0 : i64, tpu.core_type = #tpu.core_type<tc>, window_params = [{transform_indices = @transform_0, window_bounds = array<i64: 8, 128>}, {pipeline_mode = #tpu.pipeline_mode<synchronous>, transform_indices = @transform_1, window_bounds = array<i64: 128, 128>}, {pipeline_mode = #tpu.pipeline_mode<synchronous>, transform_indices = @transform_2, window_bounds = array<i64: 128, 128>}, {pipeline_mode = #tpu.pipeline_mode<synchronous>, transform_indices = @transform_3, window_bounds = array<i64: 128, 128>}, {pipeline_mode = #tpu.pipeline_mode<synchronous>, transform_indices = @transform_4, window_bounds = array<i64: 1, 128>}, {pipeline_mode = #tpu.pipeline_mode<synchronous>, transform_indices = @transform_5, window_bounds = array<i64: 1, 128>}, {pipeline_mode = #tpu.pipeline_mode<synchronous>, transform_indices = @transform_6, window_bounds = array<i64: 1, 128>}, {transform_indices = @transform_7, window_bounds = array<i64: 8, 128>}]} {
    %c0 = arith.constant 0 : index
    %c0_0 = arith.constant 0 : index
    %0 = vector.load %arg1[%c0, %c0_0] : memref<8x128xf32, #tpu.memory_space<vmem>>, vector<8x128xf32>
    %1 = arith.truncf %0 : vector<8x128xf32> to vector<8x128xbf16>
    %c0_1 = arith.constant 0 : index
    %c0_2 = arith.constant 0 : index
    %2 = vector.load %arg2[%c0_1, %c0_2] : memref<128x128xbf16, #tpu.memory_space<vmem>>, vector<128x128xbf16>
    %cst = arith.constant dense<0.000000e+00> : vector<8x128xf32>
    %3 = tpu.matmul %1, %2, %cst {dimension_numbers = #tpu.dot_dimension_numbers<[1], [0], [0], [1], [0, 0, 1, 1], [], []>} : vector<8x128xbf16>, vector<128x128xbf16>, vector<8x128xf32> -> vector<8x128xf32>
    %c0_3 = arith.constant 0 : index
    %c0_4 = arith.constant 0 : index
    %4 = vector.load %arg5[%c0_3, %c0_4] : memref<1x128xf32, #tpu.memory_space<vmem>>, vector<1x128xf32>
    %5 = vector.broadcast %4 : vector<1x128xf32> to vector<8x128xf32>
    %6 = arith.addf %3, %5 : vector<8x128xf32>
    %cst_5 = arith.constant 0.00999999977 : f32
    %7 = vector.broadcast %cst_5 : f32 to vector<8x128xf32>
    %8 = arith.mulf %7, %6 : vector<8x128xf32>
    %9 = arith.maximumf %6, %8 : vector<8x128xf32>
    %10 = arith.truncf %9 : vector<8x128xf32> to vector<8x128xbf16>
    %c0_6 = arith.constant 0 : index
    %c0_7 = arith.constant 0 : index
    %11 = vector.load %arg3[%c0_6, %c0_7] : memref<128x128xbf16, #tpu.memory_space<vmem>>, vector<128x128xbf16>
    %cst_8 = arith.constant dense<0.000000e+00> : vector<8x128xf32>
    %12 = tpu.matmul %10, %11, %cst_8 {dimension_numbers = #tpu.dot_dimension_numbers<[1], [0], [0], [1], [0, 0, 1, 1], [], []>} : vector<8x128xbf16>, vector<128x128xbf16>, vector<8x128xf32> -> vector<8x128xf32>
    %c0_9 = arith.constant 0 : index
    %c0_10 = arith.constant 0 : index
    %13 = vector.load %arg6[%c0_9, %c0_10] : memref<1x128xf32, #tpu.memory_space<vmem>>, vector<1x128xf32>
    %14 = vector.broadcast %13 : vector<1x128xf32> to vector<8x128xf32>
    %15 = arith.addf %12, %14 : vector<8x128xf32>
    %cst_11 = arith.constant 0.00999999977 : f32
    %16 = vector.broadcast %cst_11 : f32 to vector<8x128xf32>
    %17 = arith.mulf %16, %15 : vector<8x128xf32>
    %18 = arith.maximumf %15, %17 : vector<8x128xf32>
    %19 = arith.truncf %18 : vector<8x128xf32> to vector<8x128xbf16>
    %c0_12 = arith.constant 0 : index
    %c0_13 = arith.constant 0 : index
    %20 = vector.load %arg4[%c0_12, %c0_13] : memref<128x128xbf16, #tpu.memory_space<vmem>>, vector<128x128xbf16>
    %cst_14 = arith.constant dense<0.000000e+00> : vector<8x128xf32>
    %21 = tpu.matmul %19, %20, %cst_14 {dimension_numbers = #tpu.dot_dimension_numbers<[1], [0], [0], [1], [0, 0, 1, 1], [], []>} : vector<8x128xbf16>, vector<128x128xbf16>, vector<8x128xf32> -> vector<8x128xf32>
    %c0_15 = arith.constant 0 : index
    %c0_16 = arith.constant 0 : index
    %22 = vector.load %arg7[%c0_15, %c0_16] : memref<1x128xf32, #tpu.memory_space<vmem>>, vector<1x128xf32>
    %23 = vector.broadcast %22 : vector<1x128xf32> to vector<8x128xf32>
    %24 = arith.addf %21, %23 : vector<8x128xf32>
    %c0_17 = arith.constant 0 : index
    %c0_18 = arith.constant 0 : index
    %25 = vector.load %arg8[%c0_17, %c0_18] : memref<8x128xf32, #tpu.memory_space<vmem>>, vector<8x128xf32>
    tpu.vector_store %arg8[%c0_17, %c0_18], %24 {strides = array<i32>} : memref<8x128xf32, #tpu.memory_space<vmem>>, vector<8x128xf32>,
    return
  }
  func.func @transform_0(%arg0: i32) -> (i32, i32) {
    %c0_i32 = arith.constant 0 : i32
    %c0_i32_0 = arith.constant 0 : i32
    return %arg0, %c0_i32 : i32, i32
  }
  func.func @transform_1(%arg0: i32) -> (i32, i32) {
    %c0_i32 = arith.constant 0 : i32
    %c0_i32_0 = arith.constant 0 : i32
    %c0_i32_1 = arith.constant 0 : i32
    return %c0_i32, %c0_i32_0 : i32, i32
  }
  func.func @transform_2(%arg0: i32) -> (i32, i32) {
    %c0_i32 = arith.constant 0 : i32
    %c0_i32_0 = arith.constant 0 : i32
    %c0_i32_1 = arith.constant 0 : i32
    return %c0_i32, %c0_i32_0 : i32, i32
  }
  func.func @transform_3(%arg0: i32) -> (i32, i32) {
    %c0_i32 = arith.constant 0 : i32
    %c0_i32_0 = arith.constant 0 : i32
    %c0_i32_1 = arith.constant 0 : i32
    return %c0_i32, %c0_i32_0 : i32, i32
  }
  func.func @transform_4(%arg0: i32) -> (i32, i32) {
    %c0_i32 = arith.constant 0 : i32
    %c0_i32_0 = arith.constant 0 : i32
    %c0_i32_1 = arith.constant 0 : i32
    return %c0_i32, %c0_i32_0 : i32, i32
  }
  func.func @transform_5(%arg0: i32) -> (i32, i32) {
    %c0_i32 = arith.constant 0 : i32
    %c0_i32_0 = arith.constant 0 : i32
    %c0_i32_1 = arith.constant 0 : i32
    return %c0_i32, %c0_i32_0 : i32, i32
  }
  func.func @transform_6(%arg0: i32) -> (i32, i32) {
    %c0_i32 = arith.constant 0 : i32
    %c0_i32_0 = arith.constant 0 : i32
    %c0_i32_1 = arith.constant 0 : i32
    return %c0_i32, %c0_i32_0 : i32, i32
  }
  func.func @transform_7(%arg0: i32) -> (i32, i32) {
    %c0_i32 = arith.constant 0 : i32
    %c0_i32_0 = arith.constant 0 : i32
    return %arg0, %c0_i32 : i32, i32
  }
}

</mosaic_0001>

<llo_original>
// kernel: tpu_custom_call.1
$region0: #{tpu_custom_call.1}
  #allocation0 [shape = 'u32[]', space=smem, size = 0x4, offset = 0x4, fixed_abs, tag = 'smem constant byte address 0x4 - core index']
  #allocation1 [shape = 'u32[144,128]{1,0:T(1,128)}', space=vmem, size = 0x12000, scoped, tag = 'internal scratch']
  %s0 = inlined_call_operand.hbm [shape: f32[8,128], index: 0, kind: input, shape index: {}]
  %s1 = inlined_call_operand.hbm [shape: bf16[128,128], index: 1, kind: input, shape index: {}]
  %s2 = inlined_call_operand.hbm [shape: bf16[128,128], index: 2, kind: input, shape index: {}]
  %s3 = inlined_call_operand.hbm [shape: bf16[128,128], index: 3, kind: input, shape index: {}]
  %s4 = inlined_call_operand.vmem [shape: f32[1,128], index: 4, kind: input, shape index: {}]
  %s5 = inlined_call_operand.vmem [shape: f32[1,128], index: 5, kind: input, shape index: {}]
  %s6 = inlined_call_operand.vmem [shape: f32[1,128], index: 6, kind: input, shape index: {}]
  %s7 = inlined_call_operand.hbm [shape: f32[8,128], index: 7, kind: output, shape index: {}]
  %s8 = sld [smem:[#allocation0]]
  $region54: #{tpu_custom_call.1} parent=0
    _
  %s10 = ssub.s32 1, %s8
  %s11 = scalar_select 0, %s10, %s8
  $region1: #{tpu_custom_call.1} parent=0
    #allocation2 [shape = 'u8[4096]{0}', space=vmem, size = 0x1000, scoped, tag = 'input window, operand 0, single buffered']
    #allocation3 [shape = 's32[1]{0}', space=sflag, size = 0x4, scoped, tag = 'scoped memory for tpu_custom_call.1']
    #allocation4 [shape = 's32[1]{0}', space=sflag, size = 0x4, scoped, tag = 'scoped memory for tpu_custom_call.1']
    #allocation5 [shape = 'u8[32768]{0}', space=vmem, size = 0x8000, scoped, tag = 'input window, operand 1, single buffered']
    #allocation6 [shape = 's32[1]{0}', space=sflag, size = 0x4, scoped, tag = 'scoped memory for tpu_custom_call.1']
    #allocation7 [shape = 'u8[32768]{0}', space=vmem, size = 0x8000, scoped, tag = 'input window, operand 2, single buffered']
    #allocation8 [shape = 'u8[32768]{0}', space=vmem, size = 0x8000, scoped, tag = 'input window, operand 3, single buffered']
    #allocation9 [shape = 's32[1]{0}', space=sflag, size = 0x4, scoped, tag = 'scoped memory for tpu_custom_call.1']
    #allocation10 [shape = 'u8[4096]{0}', space=vmem, size = 0x1000, scoped, tag = 'output window, operand 0, single buffered']
    %12 = vsyncpa [#allocation3], 0
    %13 = vsyncpa [#allocation6], 0
    %14 = vsyncpa [#allocation9], 0
    %15 = vsyncpa [#allocation4], 0
    // Predicated region
    $region2: #{tpu_custom_call.1} parent=1 // pred_check
      _
    $region3: #{tpu_custom_call.1} parent=1 // pred_check_branch
      %17 = sbr.rel (0) target = $region5
    $region4: #{tpu_custom_call.1} parent=1 // pred_region
      %s19 = ssub.s32 128, 128
      %20 = vsyncadd [#allocation3], %s19
      %s22 = sshll.u32 [#allocation2], 4
      %s23 = int_to_ptr.vmem [resolvable:$true] %s22
      %25 = dma.hbm_to_vmem [thread:$0]  %s0, 128, %s23, [#allocation3]
    $region5: #{tpu_custom_call.1} parent=1 // pred_fallthru
      _
    // Predicated region
    $region6: #{tpu_custom_call.1} parent=1 // pred_check
      _
    $region7: #{tpu_custom_call.1} parent=1 // pred_check_branch
      %27 = sbr.rel (0) target = $region9
    $region8: #{tpu_custom_call.1} parent=1 // pred_region
      %s29 = ssub.s32 1024, 1024
      %30 = vsyncadd [#allocation6], %s29
      %s31 = sshll.u32 [#allocation5], 4
      %s32 = int_to_ptr.vmem [resolvable:$true] %s31
      %37 = dma.hbm_to_vmem [thread:$0]  %s1, 1024, %s32, [#allocation6], 64, 64, 4
    $region9: #{tpu_custom_call.1} parent=1 // pred_fallthru
      _
    // Predicated region
    $region10: #{tpu_custom_call.1} parent=1 // pred_check
      _
    $region11: #{tpu_custom_call.1} parent=1 // pred_check_branch
      %39 = sbr.rel (0) target = $region13
    $region12: #{tpu_custom_call.1} parent=1 // pred_region
      %s41 = ssub.s32 1024, 1024
      %42 = vsyncadd [#allocation6], %s41
      %s43 = sshll.u32 [#allocation7], 4
      %s44 = int_to_ptr.vmem [resolvable:$true] %s43
      %49 = dma.hbm_to_vmem [thread:$0]  %s2, 1024, %s44, [#allocation6], 64, 64, 4
    $region13: #{tpu_custom_call.1} parent=1 // pred_fallthru
      _
    // Predicated region
    $region14: #{tpu_custom_call.1} parent=1 // pred_check
      _
    $region15: #{tpu_custom_call.1} parent=1 // pred_check_branch
      %51 = sbr.rel (0) target = $region17
    $region16: #{tpu_custom_call.1} parent=1 // pred_region
      %s53 = ssub.s32 1024, 1024
      %54 = vsyncadd [#allocation9], %s53
      %s55 = sshll.u32 [#allocation8], 4
      %s56 = int_to_ptr.vmem [resolvable:$true] %s55
      %61 = dma.hbm_to_vmem [thread:$0]  %s3, 1024, %s56, [#allocation9], 64, 64, 4
    $region17: #{tpu_custom_call.1} parent=1 // pred_fallthru
      _
    // Predicated region
    $region18: #{tpu_custom_call.1} parent=1 // pred_check
      _
    $region19: #{tpu_custom_call.1} parent=1 // pred_check_branch
      %63 = sbr.rel (0) target = $region21
    $region20: #{tpu_custom_call.1} parent=1 // pred_region
      _
    $region21: #{tpu_custom_call.1} parent=1 // pred_fallthru
      _
    // Predicated region
    $region22: #{tpu_custom_call.1} parent=1 // pred_check
      _
    $region23: #{tpu_custom_call.1} parent=1 // pred_check_branch
      %65 = sbr.rel (0) target = $region25
    $region24: #{tpu_custom_call.1} parent=1 // pred_region
      _
    $region25: #{tpu_custom_call.1} parent=1 // pred_fallthru
      _
    // Predicated region
    $region26: #{tpu_custom_call.1} parent=1 // pred_check
      _
    $region27: #{tpu_custom_call.1} parent=1 // pred_check_branch
      %67 = sbr.rel (0) target = $region29
    $region28: #{tpu_custom_call.1} parent=1 // pred_region
      _
    $region29: #{tpu_custom_call.1} parent=1 // pred_fallthru
      _
    // Predicated region
    $region30: #{tpu_custom_call.1} parent=1 // pred_check
      _
    $region31: #{tpu_custom_call.1} parent=1 // pred_check_branch
      %69 = sbr.rel (0) target = $region33
    $region32: #{tpu_custom_call.1} parent=1 // pred_region
      %70 = dma.done [#allocation3], 128
    $region33: #{tpu_custom_call.1} parent=1 // pred_fallthru
      _
    // Predicated region
    $region34: #{tpu_custom_call.1} parent=1 // pred_check
      _
    $region35: #{tpu_custom_call.1} parent=1 // pred_check_branch
      %72 = sbr.rel (0) target = $region37
    $region36: #{tpu_custom_call.1} parent=1 // pred_region
      %73 = dma.done [#allocation6], 1024
    $region37: #{tpu_custom_call.1} parent=1 // pred_fallthru
      _
    // Predicated region
    $region38: #{tpu_custom_call.1} parent=1 // pred_check
      _
    $region39: #{tpu_custom_call.1} parent=1 // pred_check_branch
      %75 = sbr.rel (0) target = $region41
    $region40: #{tpu_custom_call.1} parent=1 // pred_region
      %76 = dma.done [#allocation6], 1024
    $region41: #{tpu_custom_call.1} parent=1 // pred_fallthru
      _
    // Predicated region
    $region42: #{tpu_custom_call.1} parent=1 // pred_check
      _
    $region43: #{tpu_custom_call.1} parent=1 // pred_check_branch
      %78 = sbr.rel (0) target = $region45
    $region44: #{tpu_custom_call.1} parent=1 // pred_region
      %79 = dma.done [#allocation9], 1024
    $region45: #{tpu_custom_call.1} parent=1 // pred_fallthru
      _
    %v81 = vld [vmem:[#allocation2] sm:$0xff]
    %v82 = vpack.c.bf16 %v81, %v81
    %v83 = vld [vmem:[#allocation5] sm:$0xf]
    %v84 = vld [vmem:[#allocation5 + $0x4] sm:$0xf]
    %v85 = vld [vmem:[#allocation5 + $0x8] sm:$0xf]
    %v86 = vld [vmem:[#allocation5 + $0xc] sm:$0xf]
    %v87 = vld [vmem:[#allocation5 + $0x10] sm:$0xf]
    %v88 = vld [vmem:[#allocation5 + $0x14] sm:$0xf]
    %v89 = vld [vmem:[#allocation5 + $0x18] sm:$0xf]
    %v90 = vld [vmem:[#allocation5 + $0x1c] sm:$0xf]
    %v91 = vld [vmem:[#allocation5 + $0x20] sm:$0xf]
    %v92 = vld [vmem:[#allocation5 + $0x24] sm:$0xf]
    %v93 = vld [vmem:[#allocation5 + $0x28] sm:$0xf]
    %v94 = vld [vmem:[#allocation5 + $0x2c] sm:$0xf]
    %v95 = vld [vmem:[#allocation5 + $0x30] sm:$0xf]
    %v96 = vld [vmem:[#allocation5 + $0x34] sm:$0xf]
    %v97 = vld [vmem:[#allocation5 + $0x38] sm:$0xf]
    %v98 = vld [vmem:[#allocation5 + $0x3c] sm:$0xf]
    %v99 = vld [vmem:[%s4] sm:$0x1]
    %v101 = vlaneseq
    %v102 = vshrl.u32 %v101, 7
    %v103 = vsub.s32 0, %v102
    %v104 = vrot.slane %v99, %v103
    %v122 = vunpack.c.l.b16 %v83
    %v123 = vunpack.c.l.b16 %v84
    %v124 = vunpack.c.l.b16 %v85
    %v125 = vunpack.c.l.b16 %v86
    %v126 = vunpack.c.l.b16 %v87
    %v127 = vunpack.c.l.b16 %v88
    %v128 = vunpack.c.l.b16 %v89
    %v129 = vunpack.c.l.b16 %v90
    %v130 = vunpack.c.l.b16 %v91
    %v131 = vunpack.c.l.b16 %v92
    %v132 = vunpack.c.l.b16 %v93
    %v133 = vunpack.c.l.b16 %v94
    %v134 = vunpack.c.l.b16 %v95
    %v135 = vunpack.c.l.b16 %v96
    %v136 = vunpack.c.l.b16 %v97
    %v137 = vunpack.c.l.b16 %v98
    %v138 = vpack.c.b16 %v123, %v122
    %v139 = vpack.c.b16 %v125, %v124
    %v140 = vpack.c.b16 %v127, %v126
    %v141 = vpack.c.b16 %v129, %v128
    %v142 = vpack.c.b16 %v131, %v130
    %v143 = vpack.c.b16 %v133, %v132
    %v144 = vpack.c.b16 %v135, %v134
    %v145 = vpack.c.b16 %v137, %v136
    %154 = vmatprep.subr.bf16.mxu0 0
    %155 = vmatpush1.bf16.msra.mxu0 %v138
    %156 = vmatprep.subr.bf16.mxu0 0
    %157 = vmatpush1.bf16.msra.mxu0 %v139
    %158 = vmatprep.subr.bf16.mxu0 0
    %159 = vmatpush1.bf16.msra.mxu0 %v140
    %160 = vmatprep.subr.bf16.mxu0 0
    %161 = vmatpush1.bf16.msra.mxu0 %v141
    %162 = vmatprep.subr.bf16.mxu0 0
    %163 = vmatpush1.bf16.msra.mxu0 %v142
    %164 = vmatprep.subr.bf16.mxu0 0
    %165 = vmatpush1.bf16.msra.mxu0 %v143
    %166 = vmatprep.subr.bf16.mxu0 0
    %167 = vmatpush1.bf16.msra.mxu0 %v144
    %168 = vmatprep.subr.bf16.mxu0 0
    %169 = vmatpush1.bf16.msra.mxu0 %v145
    %170 = vmatprep.subr.bf16.mxu0 0
    %171 = vmatpush1.bf16.msra.mxu0 0
    %172 = vmatprep.subr.bf16.mxu0 0
    %173 = vmatpush1.bf16.msra.mxu0 0
    %174 = vmatprep.subr.bf16.mxu0 0
    %175 = vmatpush1.bf16.msra.mxu0 0
    %176 = vmatprep.subr.bf16.mxu0 0
    %177 = vmatpush1.bf16.msra.mxu0 0
    %178 = vmatprep.subr.bf16.mxu0 0
    %179 = vmatpush1.bf16.msra.mxu0 0
    %180 = vmatprep.subr.bf16.mxu0 0
    %181 = vmatpush1.bf16.msra.mxu0 0
    %182 = vmatprep.subr.bf16.mxu0 0
    %183 = vmatpush1.bf16.msra.mxu0 0
    %184 = vmatprep.subr.bf16.mxu0 0
    %185 = vmatpush1.bf16.msra.mxu0 0
    %186 = vmatprep.mubr.bf16.mxu0 0
    %187 = vmatmul.mubr.bf16.gmra.mrb[0].mxu0 %v82
    %v188 = vpop.f32.mrb[0].mxu0
    %v189 = vadd.f32 %v104, %v188
    %v190 = vpop.f32.mrb[0].mxu0
    %v191 = vpop.f32.mrb[0].mxu0
    %v192 = vpop.f32.mrb[0].mxu0
    %193 = vdwg.mxu0
    %v194 = vmul.f32 %v189, 0.01
    %v195 = vmax.f32 %v189, %v194
    %v196 = vpack.c.bf16 %v195, %v195
    %v197 = vld [vmem:[#allocation7] sm:$0xf]
    %v198 = vld [vmem:[#allocation7 + $0x4] sm:$0xf]
    %v199 = vld [vmem:[#allocation7 + $0x8] sm:$0xf]
    %v200 = vld [vmem:[#allocation7 + $0xc] sm:$0xf]
    %v201 = vld [vmem:[#allocation7 + $0x10] sm:$0xf]
    %v202 = vld [vmem:[#allocation7 + $0x14] sm:$0xf]
    %v203 = vld [vmem:[#allocation7 + $0x18] sm:$0xf]
    %v204 = vld [vmem:[#allocation7 + $0x1c] sm:$0xf]
    %v205 = vld [vmem:[#allocation7 + $0x20] sm:$0xf]
    %v206 = vld [vmem:[#allocation7 + $0x24] sm:$0xf]
    %v207 = vld [vmem:[#allocation7 + $0x28] sm:$0xf]
    %v208 = vld [vmem:[#allocation7 + $0x2c] sm:$0xf]
    %v209 = vld [vmem:[#allocation7 + $0x30] sm:$0xf]
    %v210 = vld [vmem:[#allocation7 + $0x34] sm:$0xf]
    %v211 = vld [vmem:[#allocation7 + $0x38] sm:$0xf]
    %v212 = vld [vmem:[#allocation7 + $0x3c] sm:$0xf]
    %v213 = vld [vmem:[%s5] sm:$0x1]
    %v215 = vlaneseq
    %v216 = vshrl.u32 %v215, 7
    %v217 = vsub.s32 0, %v216
    %v218 = vrot.slane %v213, %v217
    %v236 = vunpack.c.l.b16 %v197
    %v237 = vunpack.c.l.b16 %v198
    %v238 = vunpack.c.l.b16 %v199
    %v239 = vunpack.c.l.b16 %v200
    %v240 = vunpack.c.l.b16 %v201
    %v241 = vunpack.c.l.b16 %v202
    %v242 = vunpack.c.l.b16 %v203
    %v243 = vunpack.c.l.b16 %v204
    %v244 = vunpack.c.l.b16 %v205
    %v245 = vunpack.c.l.b16 %v206
    %v246 = vunpack.c.l.b16 %v207
    %v247 = vunpack.c.l.b16 %v208
    %v248 = vunpack.c.l.b16 %v209
    %v249 = vunpack.c.l.b16 %v210
    %v250 = vunpack.c.l.b16 %v211
    %v251 = vunpack.c.l.b16 %v212
    %v252 = vpack.c.b16 %v237, %v236
    %v253 = vpack.c.b16 %v239, %v238
    %v254 = vpack.c.b16 %v241, %v240
    %v255 = vpack.c.b16 %v243, %v242
    %v256 = vpack.c.b16 %v245, %v244
    %v257 = vpack.c.b16 %v247, %v246
    %v258 = vpack.c.b16 %v249, %v248
    %v259 = vpack.c.b16 %v251, %v250
    %268 = vmatprep.subr.bf16.mxu0 0
    %269 = vmatpush1.bf16.msra.mxu0 %v252
    %270 = vmatprep.subr.bf16.mxu0 0
    %271 = vmatpush1.bf16.msra.mxu0 %v253
    %272 = vmatprep.subr.bf16.mxu0 0
    %273 = vmatpush1.bf16.msra.mxu0 %v254
    %274 = vmatprep.subr.bf16.mxu0 0
    %275 = vmatpush1.bf16.msra.mxu0 %v255
    %276 = vmatprep.subr.bf16.mxu0 0
    %277 = vmatpush1.bf16.msra.mxu0 %v256
    %278 = vmatprep.subr.bf16.mxu0 0
    %279 = vmatpush1.bf16.msra.mxu0 %v257
    %280 = vmatprep.subr.bf16.mxu0 0
    %281 = vmatpush1.bf16.msra.mxu0 %v258
    %282 = vmatprep.subr.bf16.mxu0 0
    %283 = vmatpush1.bf16.msra.mxu0 %v259
    %284 = vmatprep.subr.bf16.mxu0 0
    %285 = vmatpush1.bf16.msra.mxu0 0
    %286 = vmatprep.subr.bf16.mxu0 0
    %287 = vmatpush1.bf16.msra.mxu0 0
    %288 = vmatprep.subr.bf16.mxu0 0
    %289 = vmatpush1.bf16.msra.mxu0 0
    %290 = vmatprep.subr.bf16.mxu0 0
    %291 = vmatpush1.bf16.msra.mxu0 0
    %292 = vmatprep.subr.bf16.mxu0 0
    %293 = vmatpush1.bf16.msra.mxu0 0
    %294 = vmatprep.subr.bf16.mxu0 0
    %295 = vmatpush1.bf16.msra.mxu0 0
    %296 = vmatprep.subr.bf16.mxu0 0
    %297 = vmatpush1.bf16.msra.mxu0 0
    %298 = vmatprep.subr.bf16.mxu0 0
    %299 = vmatpush1.bf16.msra.mxu0 0
    %300 = vmatprep.mubr.bf16.mxu0 0
    %301 = vmatmul.mubr.bf16.gmra.mrb[0].mxu0 %v196
    %v302 = vpop.f32.mrb[0].mxu0
    %v303 = vadd.f32 %v218, %v302
    %v304 = vpop.f32.mrb[0].mxu0
    %v305 = vpop.f32.mrb[0].mxu0
    %v306 = vpop.f32.mrb[0].mxu0
    %307 = vdwg.mxu0
    %v308 = vmul.f32 %v303, 0.01
    %v309 = vmax.f32 %v303, %v308
    %v310 = vpack.c.bf16 %v309, %v309
    %v311 = vld [vmem:[#allocation8] sm:$0xf]
    %v312 = vld [vmem:[#allocation8 + $0x4] sm:$0xf]
    %v313 = vld [vmem:[#allocation8 + $0x8] sm:$0xf]
    %v314 = vld [vmem:[#allocation8 + $0xc] sm:$0xf]
    %v315 = vld [vmem:[#allocation8 + $0x10] sm:$0xf]
    %v316 = vld [vmem:[#allocation8 + $0x14] sm:$0xf]
    %v317 = vld [vmem:[#allocation8 + $0x18] sm:$0xf]
    %v318 = vld [vmem:[#allocation8 + $0x1c] sm:$0xf]
    %v319 = vld [vmem:[#allocation8 + $0x20] sm:$0xf]
    %v320 = vld [vmem:[#allocation8 + $0x24] sm:$0xf]
    %v321 = vld [vmem:[#allocation8 + $0x28] sm:$0xf]
    %v322 = vld [vmem:[#allocation8 + $0x2c] sm:$0xf]
    %v323 = vld [vmem:[#allocation8 + $0x30] sm:$0xf]
    %v324 = vld [vmem:[#allocation8 + $0x34] sm:$0xf]
    %v325 = vld [vmem:[#allocation8 + $0x38] sm:$0xf]
    %v326 = vld [vmem:[#allocation8 + $0x3c] sm:$0xf]
    %v327 = vld [vmem:[%s6] sm:$0x1]
    %v329 = vlaneseq
    %v330 = vshrl.u32 %v329, 7
    %v331 = vsub.s32 0, %v330
    %v332 = vrot.slane %v327, %v331
    %v350 = vunpack.c.l.b16 %v311
    %v351 = vunpack.c.l.b16 %v312
    %v352 = vunpack.c.l.b16 %v313
    %v353 = vunpack.c.l.b16 %v314
    %v354 = vunpack.c.l.b16 %v315
    %v355 = vunpack.c.l.b16 %v316
    %v356 = vunpack.c.l.b16 %v317
    %v357 = vunpack.c.l.b16 %v318
    %v358 = vunpack.c.l.b16 %v319
    %v359 = vunpack.c.l.b16 %v320
    %v360 = vunpack.c.l.b16 %v321
    %v361 = vunpack.c.l.b16 %v322
    %v362 = vunpack.c.l.b16 %v323
    %v363 = vunpack.c.l.b16 %v324
    %v364 = vunpack.c.l.b16 %v325
    %v365 = vunpack.c.l.b16 %v326
    %v366 = vpack.c.b16 %v351, %v350
    %v367 = vpack.c.b16 %v353, %v352
    %v368 = vpack.c.b16 %v355, %v354
    %v369 = vpack.c.b16 %v357, %v356
    %v370 = vpack.c.b16 %v359, %v358
    %v371 = vpack.c.b16 %v361, %v360
    %v372 = vpack.c.b16 %v363, %v362
    %v373 = vpack.c.b16 %v365, %v364
    %382 = vmatprep.subr.bf16.mxu0 0
    %383 = vmatpush1.bf16.msra.mxu0 %v366
    %384 = vmatprep.subr.bf16.mxu0 0
    %385 = vmatpush1.bf16.msra.mxu0 %v367
    %386 = vmatprep.subr.bf16.mxu0 0
    %387 = vmatpush1.bf16.msra.mxu0 %v368
    %388 = vmatprep.subr.bf16.mxu0 0
    %389 = vmatpush1.bf16.msra.mxu0 %v369
    %390 = vmatprep.subr.bf16.mxu0 0
    %391 = vmatpush1.bf16.msra.mxu0 %v370
    %392 = vmatprep.subr.bf16.mxu0 0
    %393 = vmatpush1.bf16.msra.mxu0 %v371
    %394 = vmatprep.subr.bf16.mxu0 0
    %395 = vmatpush1.bf16.msra.mxu0 %v372
    %396 = vmatprep.subr.bf16.mxu0 0
    %397 = vmatpush1.bf16.msra.mxu0 %v373
    %398 = vmatprep.subr.bf16.mxu0 0
    %399 = vmatpush1.bf16.msra.mxu0 0
    %400 = vmatprep.subr.bf16.mxu0 0
    %401 = vmatpush1.bf16.msra.mxu0 0
    %402 = vmatprep.subr.bf16.mxu0 0
    %403 = vmatpush1.bf16.msra.mxu0 0
    %404 = vmatprep.subr.bf16.mxu0 0
    %405 = vmatpush1.bf16.msra.mxu0 0
    %406 = vmatprep.subr.bf16.mxu0 0
    %407 = vmatpush1.bf16.msra.mxu0 0
    %408 = vmatprep.subr.bf16.mxu0 0
    %409 = vmatpush1.bf16.msra.mxu0 0
    %410 = vmatprep.subr.bf16.mxu0 0
    %411 = vmatpush1.bf16.msra.mxu0 0
    %412 = vmatprep.subr.bf16.mxu0 0
    %413 = vmatpush1.bf16.msra.mxu0 0
    %414 = vmatprep.mubr.bf16.mxu0 0
    %415 = vmatmul.mubr.bf16.gmra.mrb[0].mxu0 %v310
    %v416 = vpop.f32.mrb[0].mxu0
    %v417 = vadd.f32 %v332, %v416
    %v418 = vpop.f32.mrb[0].mxu0
    %v419 = vpop.f32.mrb[0].mxu0
    %v420 = vpop.f32.mrb[0].mxu0
    %421 = vdwg.mxu0
    %422 = vst [vmem:[#allocation10] sm:$0xff] %v417
    // Predicated region
    $region46: #{tpu_custom_call.1} parent=1 // pred_check
      _
    $region47: #{tpu_custom_call.1} parent=1 // pred_check_branch
      %424 = sbr.rel (0) target = $region49
    $region48: #{tpu_custom_call.1} parent=1 // pred_region
      %s426 = ssub.s32 128, 128
      %427 = vsyncadd [#allocation4], %s426
      %s429 = sshll.u32 [#allocation10], 4
      %s430 = int_to_ptr.vmem [resolvable:$true] %s429
      %432 = dma.vmem_to_hbm [thread:$0]  %s430, 128, %s7, [#allocation4]
    $region49: #{tpu_custom_call.1} parent=1 // pred_fallthru
      _
    // Predicated region
    $region50: #{tpu_custom_call.1} parent=1 // pred_check
      _
    $region51: #{tpu_custom_call.1} parent=1 // pred_check_branch
      %434 = sbr.rel (0) target = $region53
    $region52: #{tpu_custom_call.1} parent=1 // pred_region
      %435 = dma.done [#allocation4], 128
    $region53: #{tpu_custom_call.1} parent=1 // pred_fallthru
      _
    %436 = vsyncpa [#allocation3], 1
    %437 = vsyncpa [#allocation6], 1
    %438 = vsyncpa [#allocation9], 1
    %439 = vsyncpa [#allocation4], 1

</llo_original>
